<compile_context>
chip_gen: v7x
topology: tpu7x:2x2x1
jax: 0.10.0
libtpu: 0.0.40
codegen_flags: <defaults>
</compile_context>

<pallas_src>
import functools

import jax
import jax.numpy as jnp
from jax.experimental import pallas as pl
from jax.experimental.pallas import tpu as pltpu


def _fc_block_kernel(seed_ref, x_ref, w_ref, b_ref, o_ref, *,
                     tile_b, in_channels, drop_rate, training):
    x = x_ref[...]  # (tile_b, in_channels), native dtype (bf16 stays bf16)

    if training and drop_rate > 0.0:
        # Portable counter-based hash PRNG (splitmix32 flavor). Uses only
        # integer VPU ops, so it lowers on TPU *and* in interpret mode.
        # The counter is the global (row, col) element index, so the mask is
        # independent of the batch tiling and differs across grid programs.
        row = jax.lax.broadcasted_iota(jnp.uint32, x.shape, 0)
        col = jax.lax.broadcasted_iota(jnp.uint32, x.shape, 1)
        row0 = (pl.program_id(0) * tile_b).astype(jnp.uint32)
        gid = (row0 + row) * jnp.uint32(in_channels) + col

        seed = seed_ref[0].astype(jnp.uint32)
        h = gid + seed * jnp.uint32(0x9E3779B1)
        h = (h ^ (h >> 16)) * jnp.uint32(0x7FEB352D)
        h = (h ^ (h >> 15)) * jnp.uint32(0x846CA68B)
        bits = h ^ (h >> 16)

        # Integer threshold compare; keep-probability = 1 - drop_rate.
        thr = min(int(drop_rate * 4294967296.0), 4294967295)
        keep = bits >= jnp.uint32(thr)
        inv_keep = 1.0 / (1.0 - drop_rate)
        # Single select carrying the 1/(1-p) scale (f32 mask math, one mul).
        x = x * jnp.where(keep, inv_keep, 0.0).astype(x.dtype)
    # else: eval-mode dropout is the identity.

    # nn.Linear: contract feature axis of x with in_channels axis of W
    # (stored PyTorch-style (out, in)) -> no explicit transpose, f32 acc.
    y = jax.lax.dot_general(
        x, w_ref[...],
        dimension_numbers=(((1,), (1,)), ((), ())),
        preferred_element_type=jnp.float32)
    o_ref[...] = (y + b_ref[...].astype(jnp.float32)).astype(o_ref.dtype)


def fc_block(x, weight, bias, *, drop_rate=0.2, training=False, seed=0):
    """Pallas implementation of FCBlock.forward.

    x:      (B, F) with F >= in_channels
    weight: (out_channels, in_channels)   (PyTorch nn.Linear layout)
    bias:   (out_channels,)
    """
    out_channels, in_channels = weight.shape
    B = x.shape[0]
    assert x.shape[1] >= in_channels

    # narrow(1, 0, in_channels) before the kernel: dropout-then-narrow equals
    # narrow-then-dropout for the retained columns, and this cuts HBM->VMEM
    # bytes and PRNG/VPU work to only the features actually used.
    x_in = x[:, :in_channels]

    # Batch tiling: whole batch in one tile when small, otherwise 512-row
    # tiles (8-divisible, sized well inside v7x's 64 MiB VMEM and fine on
    # v5e/v6e). Grid over batch gives double-buffered DMA overlap.
    tile_b = B if B <= 512 else 512
    grid = (pl.cdiv(B, tile_b),)

    seed_arr = jnp.asarray([seed], dtype=jnp.int32)
    bias2d = bias.reshape(1, out_channels)

    kernel = functools.partial(
        _fc_block_kernel,
        tile_b=tile_b,
        in_channels=in_channels,
        drop_rate=float(drop_rate),
        training=bool(training),
    )

    cost = pl.CostEstimate(
        flops=2 * B * in_channels * out_channels,
        transcendentals=0,
        bytes_accessed=int(x_in.size * x_in.dtype.itemsize
                           + weight.size * weight.dtype.itemsize
                           + bias.size * bias.dtype.itemsize
                           + B * out_channels * x.dtype.itemsize),
    )

    return pl.pallas_call(
        kernel,
        out_shape=jax.ShapeDtypeStruct((B, out_channels), x.dtype),
        grid_spec=pltpu.PrefetchScalarGridSpec(
            num_scalar_prefetch=1,                      # seed -> SMEM
            grid=grid,
            in_specs=[
                pl.BlockSpec((tile_b, in_channels), lambda i, seed: (i, 0)),
                pl.BlockSpec((out_channels, in_channels), lambda i, seed: (0, 0)),
                pl.BlockSpec((1, out_channels), lambda i, seed: (0, 0)),
            ],
            out_specs=pl.BlockSpec((tile_b, out_channels), lambda i, seed: (i, 0)),
        ),
        compiler_params=pltpu.CompilerParams(
            dimension_semantics=("parallel",)),          # both TCs on v7x
        cost_estimate=cost,
    )(seed_arr, x_in, weight, bias2d)


if __name__ == "__main__":
    # Small shapes consistent with the module's forward:
    #   x has more features (F=48) than in_channels (32); forward narrows to 32.
    B, F = 8, 48
    in_channels, out_channels = 32, 16

    key = jax.random.PRNGKey(0)
    kx, kw, kb = jax.random.split(key, 3)

    x = jax.random.normal(kx, (B, F), dtype=jnp.float32)
    # Deterministic parameter init (PyTorch-like uniform bound 1/sqrt(fan_in)).
    bound = 1.0 / (in_channels ** 0.5)
    weight = jax.random.uniform(kw, (out_channels, in_channels),
                                minval=-bound, maxval=bound, dtype=jnp.float32)
    bias = jax.random.uniform(kb, (out_channels,),
                              minval=-bound, maxval=bound, dtype=jnp.float32)

    # Eval-mode forward (dropout = identity), deterministic.
    out = jax.block_until_ready(
        fc_block(x, weight, bias, drop_rate=0.2, training=False))
    ref = x[:, :in_channels] @ weight.T + bias
    assert out.shape == (B, out_channels)
    assert jnp.allclose(out, ref, atol=1e-5, rtol=1e-5)

    # Train-mode (stochastic dropout) path.
    out_train = jax.block_until_ready(
        fc_block(x, weight, bias, drop_rate=0.2, training=True, seed=123))
    assert out_train.shape == (B, out_channels)
    assert bool(jnp.all(jnp.isfinite(out_train)))

    print("KERNEL_OK")
</pallas_src>

<mosaic_0001>
module attributes {stable_mosaic.version = 11 : i64} {
  func.func @_fc_block_kernel(%arg0: i32, %arg1: memref<1xi32, #tpu.memory_space<smem>>, %arg2: memref<8x32xf32, #tpu.memory_space<vmem>>, %arg3: memref<16x32xf32, #tpu.memory_space<vmem>>, %arg4: memref<1x16xf32, #tpu.memory_space<vmem>>, %arg5: memref<8x16xf32, #tpu.memory_space<vmem>>) attributes {dimension_semantics = [#tpu.dimension_semantics<parallel>], iteration_bounds = array<i64: 1>, scalar_prefetch = 1 : i64, scratch_operands = 0 : i64, tpu.core_type = #tpu.core_type<tc>, window_params = [{transform_indices = @transform_0, window_bounds = array<i64: 8, 32>}, {pipeline_mode = #tpu.pipeline_mode<synchronous>, transform_indices = @transform_1, window_bounds = array<i64: 16, 32>}, {pipeline_mode = #tpu.pipeline_mode<synchronous>, transform_indices = @transform_2, window_bounds = array<i64: 1, 16>}, {transform_indices = @transform_3, window_bounds = array<i64: 8, 16>}]} {
    %c0 = arith.constant 0 : index
    %c0_0 = arith.constant 0 : index
    %0 = vector.load %arg2[%c0, %c0_0] : memref<8x32xf32, #tpu.memory_space<vmem>>, vector<8x32xf32>
    %c0_1 = arith.constant 0 : index
    %c0_2 = arith.constant 0 : index
    %1 = vector.load %arg3[%c0_1, %c0_2] : memref<16x32xf32, #tpu.memory_space<vmem>>, vector<16x32xf32>
    %cst = arith.constant dense<0.000000e+00> : vector<8x16xf32>
    %2 = tpu.matmul %0, %1, %cst {dimension_numbers = #tpu.dot_dimension_numbers<[1], [1], [0], [0], [0, 0, 1, 0], [], []>} : vector<8x32xf32>, vector<16x32xf32>, vector<8x16xf32> -> vector<8x16xf32>
    %c0_3 = arith.constant 0 : index
    %c0_4 = arith.constant 0 : index
    %3 = vector.load %arg4[%c0_3, %c0_4] : memref<1x16xf32, #tpu.memory_space<vmem>>, vector<1x16xf32>
    %4 = vector.broadcast %3 : vector<1x16xf32> to vector<8x16xf32>
    %5 = arith.addf %2, %4 : vector<8x16xf32>
    %c0_5 = arith.constant 0 : index
    %c0_6 = arith.constant 0 : index
    %6 = vector.load %arg5[%c0_5, %c0_6] : memref<8x16xf32, #tpu.memory_space<vmem>>, vector<8x16xf32>
    tpu.vector_store %arg5[%c0_5, %c0_6], %5 {strides = array<i32>} : memref<8x16xf32, #tpu.memory_space<vmem>>, vector<8x16xf32>,
    return
  }
  func.func @transform_0(%arg0: i32, %arg1: memref<1xi32, #tpu.memory_space<smem>>) -> (i32, i32) {
    %c0_i32 = arith.constant 0 : i32
    %c0_i32_0 = arith.constant 0 : i32
    return %arg0, %c0_i32 : i32, i32
  }
  func.func @transform_1(%arg0: i32, %arg1: memref<1xi32, #tpu.memory_space<smem>>) -> (i32, i32) {
    %c0_i32 = arith.constant 0 : i32
    %c0_i32_0 = arith.constant 0 : i32
    %c0_i32_1 = arith.constant 0 : i32
    return %c0_i32, %c0_i32_0 : i32, i32
  }
  func.func @transform_2(%arg0: i32, %arg1: memref<1xi32, #tpu.memory_space<smem>>) -> (i32, i32) {
    %c0_i32 = arith.constant 0 : i32
    %c0_i32_0 = arith.constant 0 : i32
    %c0_i32_1 = arith.constant 0 : i32
    return %c0_i32, %c0_i32_0 : i32, i32
  }
  func.func @transform_3(%arg0: i32, %arg1: memref<1xi32, #tpu.memory_space<smem>>) -> (i32, i32) {
    %c0_i32 = arith.constant 0 : i32
    %c0_i32_0 = arith.constant 0 : i32
    return %arg0, %c0_i32 : i32, i32
  }
}

</mosaic_0001>

<llo_original>
// kernel: tpu_custom_call.1
$region0: #{tpu_custom_call.1}
  #allocation0 [shape = 'u32[]', space=smem, size = 0x4, offset = 0x4, fixed_abs, tag = 'smem constant byte address 0x4 - core index']
  #allocation1 [shape = 'u32[144,128]{1,0:T(1,128)}', space=vmem, size = 0x12000, scoped, tag = 'internal scratch']
  #allocation2 [shape = 's32[1]{0}', space=sflag, size = 0x4, scoped, tag = 'scoped memory for tpu_custom_call.1']
  #allocation3 [shape = 's32[1]{0:T(128)S(6)}', space=smem, size = 0x200, scoped, tag = 'prefetched SMEM operand 0']
  %s0 = inlined_call_operand.<no memory space> [shape: s32[1], index: 0, kind: input, shape index: {}]
  %s1 = inlined_call_operand.hbm [shape: f32[8,32], index: 1, kind: input, shape index: {}]
  %s2 = inlined_call_operand.hbm [shape: f32[16,32], index: 2, kind: input, shape index: {}]
  %s3 = inlined_call_operand.vmem [shape: f32[1,16], index: 3, kind: input, shape index: {}]
  %s4 = inlined_call_operand.hbm [shape: f32[8,16], index: 4, kind: output, shape index: {}]
  %s5 = sld [smem:[#allocation0]]
  $region30: #{tpu_custom_call.1} parent=0
    _
  %s7 = ssub.s32 1, %s5
  %s8 = scalar_select 0, %s7, %s5
  %9 = sst [smem:[#allocation3]] %s0
  $region1: #{tpu_custom_call.1} parent=0
    #allocation4 [shape = 'u8[4096]{0}', space=vmem, size = 0x1000, scoped, tag = 'input window, operand 1, single buffered']
    #allocation5 [shape = 's32[1]{0}', space=sflag, size = 0x4, scoped, tag = 'scoped memory for tpu_custom_call.1']
    #allocation6 [shape = 's32[1]{0}', space=sflag, size = 0x4, scoped, tag = 'scoped memory for tpu_custom_call.1']
    #allocation7 [shape = 'u8[8192]{0}', space=vmem, size = 0x2000, scoped, tag = 'input window, operand 2, single buffered']
    #allocation8 [shape = 's32[1]{0}', space=sflag, size = 0x4, scoped, tag = 'scoped memory for tpu_custom_call.1']
    #allocation9 [shape = 'u8[4096]{0}', space=vmem, size = 0x1000, scoped, tag = 'output window, operand 0, single buffered']
    %10 = vsyncpa [#allocation5], 0
    %11 = vsyncpa [#allocation8], 0
    %12 = vsyncpa [#allocation6], 0
    // Predicated region
    $region2: #{tpu_custom_call.1} parent=1 // pred_check
      _
    $region3: #{tpu_custom_call.1} parent=1 // pred_check_branch
      %14 = sbr.rel (0) target = $region5
    $region4: #{tpu_custom_call.1} parent=1 // pred_region
      %s16 = ssub.s32 128, 128
      %17 = vsyncadd [#allocation5], %s16
      %s19 = sshll.u32 [#allocation4], 4
      %s20 = int_to_ptr.vmem [resolvable:$true] %s19
      %22 = dma.hbm_to_vmem [thread:$0]  %s1, 128, %s20, [#allocation5]
    $region5: #{tpu_custom_call.1} parent=1 // pred_fallthru
      _
    // Predicated region
    $region6: #{tpu_custom_call.1} parent=1 // pred_check
      _
    $region7: #{tpu_custom_call.1} parent=1 // pred_check_branch
      %24 = sbr.rel (0) target = $region9
    $region8: #{tpu_custom_call.1} parent=1 // pred_region
      %s26 = ssub.s32 256, 256
      %27 = vsyncadd [#allocation8], %s26
      %s28 = sshll.u32 [#allocation7], 4
      %s29 = int_to_ptr.vmem [resolvable:$true] %s28
      %34 = dma.hbm_to_vmem [thread:$0]  %s2, 256, %s29, [#allocation8], 128, 128, 8
    $region9: #{tpu_custom_call.1} parent=1 // pred_fallthru
      _
    // Predicated region
    $region10: #{tpu_custom_call.1} parent=1 // pred_check
      _
    $region11: #{tpu_custom_call.1} parent=1 // pred_check_branch
      %36 = sbr.rel (0) target = $region13
    $region12: #{tpu_custom_call.1} parent=1 // pred_region
      _
    $region13: #{tpu_custom_call.1} parent=1 // pred_fallthru
      _
    // Predicated region
    $region14: #{tpu_custom_call.1} parent=1 // pred_check
      _
    $region15: #{tpu_custom_call.1} parent=1 // pred_check_branch
      %38 = sbr.rel (0) target = $region17
    $region16: #{tpu_custom_call.1} parent=1 // pred_region
      %39 = dma.done [#allocation5], 128
    $region17: #{tpu_custom_call.1} parent=1 // pred_fallthru
      _
    // Predicated region
    $region18: #{tpu_custom_call.1} parent=1 // pred_check
      _
    $region19: #{tpu_custom_call.1} parent=1 // pred_check_branch
      %41 = sbr.rel (0) target = $region21
    $region20: #{tpu_custom_call.1} parent=1 // pred_region
      %42 = dma.done [#allocation8], 256
    $region21: #{tpu_custom_call.1} parent=1 // pred_fallthru
      _
    %v43 = vld [vmem:[#allocation4] sm:$0xff]
    %v44 = vld [vmem:[#allocation7] sm:$0xff]
    %v45 = vld [vmem:[#allocation7 + $0x8] sm:$0xff]
    %v46 = vld [vmem:[%s3] sm:$0x1]
    %v48 = vlaneseq
    %v49 = vshrl.u32 %v48, 7
    %v50 = vsub.s32 0, %v49
    %v51 = vrot.slane %v46, %v50
    %vm53 = vcmask 261120
    %v55 = vsel %vm53, %v43, 0
    %v58 = vsel %vm53, %v44, 0
    %v61 = vsel %vm53, %v45, 0
    %63 = vmatprep.subr.mxu0 0.0
    %64 = vmatpush1.xpose.msra.mxu0 %v58
    %65 = vmatprep.subr.mxu0 0.0
    %66 = vmatpush1.xpose.msra.mxu0 %v61
    %67 = vmatprep.subr.mxu0 0.0
    %68 = vmatpush1.xpose.msra.mxu0 0.0
    %69 = vmatprep.subr.mxu0 0.0
    %70 = vmatpush1.xpose.msra.mxu0 0.0
    %71 = vmatprep.subr.mxu0 0.0
    %72 = vmatpush1.xpose.msra.mxu0 0.0
    %73 = vmatprep.subr.mxu0 0.0
    %74 = vmatpush1.xpose.msra.mxu0 0.0
    %75 = vmatprep.subr.mxu0 0.0
    %76 = vmatpush1.xpose.msra.mxu0 0.0
    %77 = vmatprep.subr.mxu0 0.0
    %78 = vmatpush1.xpose.msra.mxu0 0.0
    %79 = vmatprep.subr.mxu0 0.0
    %80 = vmatpush1.xpose.msra.mxu0 0.0
    %81 = vmatprep.subr.mxu0 0.0
    %82 = vmatpush1.xpose.msra.mxu0 0.0
    %83 = vmatprep.subr.mxu0 0.0
    %84 = vmatpush1.xpose.msra.mxu0 0.0
    %85 = vmatprep.subr.mxu0 0.0
    %86 = vmatpush1.xpose.msra.mxu0 0.0
    %87 = vmatprep.subr.mxu0 0.0
    %88 = vmatpush1.xpose.msra.mxu0 0.0
    %89 = vmatprep.subr.mxu0 0.0
    %90 = vmatpush1.xpose.msra.mxu0 0.0
    %91 = vmatprep.subr.mxu0 0.0
    %92 = vmatpush1.xpose.msra.mxu0 0.0
    %93 = vmatprep.subr.mxu0 0.0
    %94 = vmatpush1.xpose.msra.mxu0 0.0
    %95 = vmatprep.subr.mxu0 0.0
    %96 = vmatpush1.xpose.msra.mxu0 0.0
    %97 = vmatprep.subr.mxu0 0.0
    %98 = vmatpush1.xpose.msra.mxu0 0.0
    %99 = vmatprep.subr.mxu0 0.0
    %100 = vmatpush1.xpose.msra.mxu0 0.0
    %101 = vmatprep.subr.mxu0 0.0
    %102 = vmatpush1.xpose.msra.mxu0 0.0
    %103 = vmatprep.subr.mxu0 0.0
    %104 = vmatpush1.xpose.msra.mxu0 0.0
    %105 = vmatprep.subr.mxu0 0.0
    %106 = vmatpush1.xpose.msra.mxu0 0.0
    %107 = vmatprep.subr.mxu0 0.0
    %108 = vmatpush1.xpose.msra.mxu0 0.0
    %109 = vmatprep.subr.mxu0 0.0
    %110 = vmatpush1.xpose.msra.mxu0 0.0
    %111 = vmatprep.subr.mxu0 0.0
    %112 = vmatpush1.xpose.msra.mxu0 0.0
    %113 = vmatprep.subr.mxu0 0.0
    %114 = vmatpush1.xpose.msra.mxu0 0.0
    %115 = vmatprep.subr.mxu0 0.0
    %116 = vmatpush1.xpose.msra.mxu0 0.0
    %117 = vmatprep.subr.mxu0 0.0
    %118 = vmatpush1.xpose.msra.mxu0 0.0
    %119 = vmatprep.subr.mxu0 0.0
    %120 = vmatpush1.xpose.msra.mxu0 0.0
    %121 = vmatprep.subr.mxu0 0.0
    %122 = vmatpush1.xpose.msra.mxu0 0.0
    %123 = vmatprep.subr.mxu0 0.0
    %124 = vmatpush1.xpose.msra.mxu0 0.0
    %125 = vmatprep.subr.mxu0 0.0
    %126 = vmatpush1.xpose.msra.mxu0 0.0
    %127 = vmatprep.mubr.f32.mxu0 0.0
    %128 = vmatmul.mubr.f32.gmra.mrb[0].mxu0 %v55
    %v129 = vpop.f32.mrb[0].mxu0
    %v130 = vadd.f32 %v51, %v129
    %v131 = vpop.f32.mrb[0].mxu0
    %132 = vdwg.mxu0
    %vm133 = vcmask 130048
    %134 = vst.msk [vmem:[#allocation9] sm:$0xff] %vm133, %v130
    // Predicated region
    $region22: #{tpu_custom_call.1} parent=1 // pred_check
      _
    $region23: #{tpu_custom_call.1} parent=1 // pred_check_branch
      %136 = sbr.rel (0) target = $region25
    $region24: #{tpu_custom_call.1} parent=1 // pred_region
      %s138 = ssub.s32 128, 128
      %139 = vsyncadd [#allocation6], %s138
      %s141 = sshll.u32 [#allocation9], 4
      %s142 = int_to_ptr.vmem [resolvable:$true] %s141
      %144 = dma.vmem_to_hbm [thread:$0]  %s142, 128, %s4, [#allocation6]
    $region25: #{tpu_custom_call.1} parent=1 // pred_fallthru
      _
    // Predicated region
    $region26: #{tpu_custom_call.1} parent=1 // pred_check
      _
    $region27: #{tpu_custom_call.1} parent=1 // pred_check_branch
      %146 = sbr.rel (0) target = $region29
    $region28: #{tpu_custom_call.1} parent=1 // pred_region
      %147 = dma.done [#allocation6], 128
    $region29: #{tpu_custom_call.1} parent=1 // pred_fallthru
      _
    %148 = vsyncpa [#allocation5], 1
    %149 = vsyncpa [#allocation8], 1
    %150 = vsyncpa [#allocation6], 1

</llo_original>
